<compile_context>
chip_gen: v7x
topology: tpu7x:2x2x1
jax: 0.10.0
libtpu: 0.0.40
codegen_flags: <defaults>
</compile_context>

<pallas_src>
import numpy as np
import jax
import jax.numpy as jnp
from jax import lax
from jax.experimental import pallas as pl
from jax.experimental.pallas import tpu as pltpu


# Sublane alignment for a *tiled* time axis: 16 is the bf16 min tile and a multiple
# of the f32 min tile (8), so it is legal for bf16/f32 activations and the f32 table.
_T_ALIGN = 16

# Conservative double-buffered VMEM budget: fits under every generation's *default*
# scoped-VMEM limit (16 MiB v5e, 32 MiB v6e/v7x) and far below v7x's 64 MiB physical
# VMEM; ~512-wide tiles already reach ~85% of HBM roofline, so bigger buys nothing.
_DEFAULT_VMEM_BUDGET = 10 * 1024 * 1024


def build_position_encoding_table(model_dim: int, max_seq_len: int) -> jnp.ndarray:
    """Sinusoidal PE rows WITHOUT the pad row (row t == PyTorch embedding row t+1).

    Same math as the PyTorch PositionEncoding.__init__; dropping the zero pad row here
    (instead of slicing it off per forward call) keeps the wrapper copy-free and the
    in-kernel table view aligned at row 0.
    """
    position_encoding = np.array(
        [
            [pos / np.power(1000, 2.0 * (j // 2) / model_dim) for j in range(model_dim)]
            for pos in range(max_seq_len)
        ]
    )
    position_encoding[:, 0::2] = np.sin(position_encoding[:, 0::2])
    position_encoding[:, 1::2] = np.cos(position_encoding[:, 1::2])
    return jnp.asarray(position_encoding.astype(np.float32))  # (max_seq_len, model_dim)


def _embed_add_pe_kernel(len_ref, tok_ref, table_ref, out_ref):
    """out[b, t, :] = tok[b, t, :] + (t < len[b] ? table[t, :] : 0)

    len_ref   : SMEM (batch,) int32        -- scalar-prefetched sequence lengths
    tok_ref   : VMEM (b_block, t_block, D) -- token-embedding tile
    table_ref : VMEM (t_block, D) f32      -- PE rows [t0, t0 + t_block)
    out_ref   : VMEM (b_block, t_block, D)
    """
    b_block, t_block, _ = out_ref.shape
    t0 = pl.program_id(0) * t_block          # time is the outer grid axis
    b0 = pl.program_id(1) * b_block          # batch is the inner grid axis
    batch_total = len_ref.shape[0]

    # Global time index of every row in this tile (shared across the batch tile).
    t_idx = t0 + lax.broadcasted_iota(jnp.int32, (t_block, 1), 0)   # (t_block, 1)
    table = table_ref[...]                                          # (t_block, D) f32

    # Per-sequence masked add. Lengths are scalar SMEM reads — no lane-sparse
    # (b, 1, 1) VMEM stream, no extra per-step DMA. b_block is kept small by the
    # block picker, so this static unroll stays short.
    for b in range(b_block):
        # Clamp the scalar index for padded batch blocks (those output rows are
        # discarded at writeback; the clamped length never indexes the table).
        row = jnp.minimum(b0 + b, batch_total - 1)
        seq_len = len_ref[row]
        pe = jnp.where(t_idx < seq_len, table, 0.0)                 # (t_block, D) f32
        out_ref[b] = (tok_ref[b].astype(jnp.float32) + pe).astype(out_ref.dtype)


def _pick_block_sizes(batch, max_len, model_dim, out_itemsize, tok_itemsize,
                      vmem_budget_bytes):
    """Pick (b_block, t_block) from a VMEM byte budget.

    Double-buffered footprint = 2 * [ b*t*D*(out_bytes + tok_bytes) + t*D*4 (f32 table) ].
    """
    def footprint(bb, tb):
        return 2 * (bb * tb * model_dim * (out_itemsize + tok_itemsize)
                    + tb * model_dim * 4)

    b_block, t_block = batch, max_len

    # Shrink the batch tile first: time is the outer grid axis, so the table block is
    # reused (not re-fetched) across consecutive batch tiles — batch tiling is cheap.
    while b_block > 1 and footprint(b_block, t_block) > vmem_budget_bytes:
        b_block = (b_block + 1) // 2

    # Then shrink the time tile, keeping it sublane-aligned once it is tiled.
    while t_block > _T_ALIGN and footprint(b_block, t_block) > vmem_budget_bytes:
        half = (t_block + 1) // 2
        t_block = max(_T_ALIGN, (half // _T_ALIGN) * _T_ALIGN)

    # Bound the in-kernel unroll over the batch tile (only binds at tiny T*D shapes
    # where this op is microseconds anyway).
    b_block = min(b_block, 16)

    # v7x has two TensorCores: make sure at least one "parallel" grid axis has >= 2
    # steps so both cores get work (no effect on single-core v5e/v6e).
    if pl.cdiv(batch, b_block) * pl.cdiv(max_len, t_block) < 2:
        if batch >= 2:
            b_block = (batch + 1) // 2
        elif max_len >= 2 * _T_ALIGN:
            t_block = max(_T_ALIGN, ((max_len // 2) // _T_ALIGN) * _T_ALIGN)

    return b_block, t_block


def embed_add_position_encoding(tok_emb, input_len, pe_table, *, out_dtype=None,
                                b_block=None, t_block=None,
                                vmem_budget_bytes=_DEFAULT_VMEM_BUDGET):
    """Fused embedding-stage forward.

    tok_emb   : (batch, T, model_dim) float (the nn.Embedding output; gather stays in XLA)
    input_len : (batch,) int — per-sequence lengths
    pe_table  : (R, model_dim) float32 with R >= T, row t = PE for position t+1 (1-based)
    Returns (batch, T, model_dim) in `out_dtype` (default: tok_emb.dtype).
    """
    batch, max_len, model_dim = tok_emb.shape
    if out_dtype is None:
        out_dtype = tok_emb.dtype

    pe_table = pe_table.astype(jnp.float32)
    if pe_table.shape[0] != max_len:
        # Only when the caller passes a longer table; pass an exactly-(T, D) table to
        # keep the wrapper copy-free.
        assert pe_table.shape[0] >= max_len and pe_table.shape[1] == model_dim
        pe_table = lax.slice(pe_table, (0, 0), (max_len, model_dim))

    lens = input_len.reshape(batch).astype(jnp.int32)

    out_itemsize = jnp.dtype(out_dtype).itemsize
    tok_itemsize = jnp.dtype(tok_emb.dtype).itemsize
    auto_b, auto_t = _pick_block_sizes(batch, max_len, model_dim,
                                       out_itemsize, tok_itemsize, vmem_budget_bytes)
    b_block = auto_b if b_block is None else min(int(b_block), batch)
    t_block = auto_t if t_block is None else int(t_block)
    assert t_block == max_len or t_block % _T_ALIGN == 0, (
        "a tiled time axis must be a multiple of 16 (bf16 min sublane tile)")

    # Time OUTER, batch INNER: the table block index only changes with the outer axis,
    # so Pallas skips the redundant table DMA across consecutive batch tiles.
    grid = (pl.cdiv(max_len, t_block), pl.cdiv(batch, b_block))

    return pl.pallas_call(
        _embed_add_pe_kernel,
        out_shape=jax.ShapeDtypeStruct((batch, max_len, model_dim), out_dtype),
        grid_spec=pltpu.PrefetchScalarGridSpec(
            num_scalar_prefetch=1,   # input_len -> SMEM; read as scalars in-kernel
            grid=grid,
            in_specs=[
                pl.BlockSpec((b_block, t_block, model_dim),
                             lambda ti, bi, lens_ref: (bi, ti, 0)),
                pl.BlockSpec((t_block, model_dim),
                             lambda ti, bi, lens_ref: (ti, 0)),
            ],
            out_specs=pl.BlockSpec((b_block, t_block, model_dim),
                                   lambda ti, bi, lens_ref: (bi, ti, 0)),
        ),
        compiler_params=pltpu.CompilerParams(
            dimension_semantics=("parallel", "parallel"),
        ),
    )(lens, tok_emb, pe_table)


if __name__ == "__main__":
    # Small demo shapes (model_dim multiple of 128 -> lane-dense stores).  Note: at
    # shapes this small the fixed pallas_call overhead dominates; the kernel pays off
    # at production (B, T, D) where HBM streaming dominates.
    model_dim = 128
    max_seq_len = 32          # also the padded sequence width T in this demo
    batch = 4
    vocab_size = 50

    key = jax.random.PRNGKey(0)
    k_len, k_tok, k_emb = jax.random.split(key, 3)

    input_len = jax.random.randint(k_len, (batch,), 1, max_seq_len + 1, dtype=jnp.int32)

    # Token ids padded with 0 beyond each sequence's length (padding_idx=0).
    pos = jnp.arange(max_seq_len)[None, :]
    tokens = jax.random.randint(k_tok, (batch, max_seq_len), 1, vocab_size + 1,
                                dtype=jnp.int32)
    tokens = jnp.where(pos < input_len[:, None], tokens, 0)

    # seq_embedding table (vocab+1, D) with a zero padding row; the gather stays in XLA.
    emb = jax.random.normal(k_emb, (vocab_size + 1, model_dim), dtype=jnp.float32)
    emb = emb.at[0].set(0.0).astype(jnp.bfloat16)
    tok_emb = jnp.take(emb, tokens, axis=0)                  # (B, T, D) bf16

    pe_table = build_position_encoding_table(model_dim, max_seq_len)  # (T, D) f32

    out = embed_add_position_encoding(tok_emb, input_len, pe_table,
                                      out_dtype=jnp.bfloat16)
    out = jax.block_until_ready(out)

    # Reference: exactly the PyTorch Decoder/Encoder embedding stage
    # (nn.Embedding(padding_idx=0) token gather + PositionEncoding gather of
    #  input_pos = [1..len, 0...] from the pad-row table, then the residual add).
    table_with_pad = jnp.concatenate(
        [jnp.zeros((1, model_dim), jnp.float32), pe_table], axis=0)
    t1 = jnp.arange(1, max_seq_len + 1)[None, :]
    input_pos = jnp.where(t1 <= input_len[:, None], t1, 0)
    pe_ref = jnp.take(table_with_pad, input_pos, axis=0)     # (B, T, D) f32
    ref = (tok_emb.astype(jnp.float32) + pe_ref).astype(jnp.bfloat16)

    assert out.shape == ref.shape and out.dtype == ref.dtype, (out.shape, out.dtype)
    np.testing.assert_allclose(np.asarray(out, dtype=np.float32),
                               np.asarray(ref, dtype=np.float32), rtol=0, atol=0)

    # TODO(synk): remaining Transformer submodules (token-embedding gather, multi-head
    # attention, feed-forward, layer-norm, final linear + cross-entropy) stay in plain
    # JAX/XLA and are outside this kernel's scope.
    print("KERNEL_OK")
</pallas_src>

<mosaic_0001>
module attributes {stable_mosaic.version = 11 : i64} {
  func.func @_embed_add_pe_kernel(%arg0: i32, %arg1: i32, %arg2: memref<4xi32, #tpu.memory_space<smem>>, %arg3: memref<2x32x128xbf16, #tpu.memory_space<vmem>>, %arg4: memref<32x128xf32, #tpu.memory_space<vmem>>, %arg5: memref<2x32x128xbf16, #tpu.memory_space<vmem>>) attributes {dimension_semantics = [#tpu.dimension_semantics<parallel>, #tpu.dimension_semantics<parallel>], iteration_bounds = array<i64: 1, 2>, scalar_prefetch = 1 : i64, scratch_operands = 0 : i64, tpu.core_type = #tpu.core_type<tc>, window_params = [{transform_indices = @transform_0, window_bounds = array<i64: 2, 32, 128>}, {transform_indices = @transform_1, window_bounds = array<i64: 32, 128>}, {transform_indices = @transform_2, window_bounds = array<i64: 2, 32, 128>}]} {
    %c32_i32 = arith.constant 32 : i32
    %0 = arith.muli %arg0, %c32_i32 : i32
    %c2_i32 = arith.constant 2 : i32
    %1 = arith.muli %arg1, %c2_i32 : i32
    %2 = tpu.iota {dimensions = array<i32: 0>} : vector<32x1xi32>
    %3 = vector.broadcast %0 : i32 to vector<32x1xi32>
    %4 = arith.addi %3, %2 : vector<32x1xi32>
    %c0 = arith.constant 0 : index
    %c0_0 = arith.constant 0 : index
    %5 = vector.load %arg4[%c0, %c0_0] : memref<32x128xf32, #tpu.memory_space<vmem>>, vector<32x128xf32>
    %c0_i32 = arith.constant 0 : i32
    %6 = arith.addi %1, %c0_i32 : i32
    %c3_i32 = arith.constant 3 : i32
    %7 = arith.minsi %6, %c3_i32 : i32
    %8 = arith.index_cast %7 : i32 to index
    %9 = memref.load %arg2[%8] : memref<4xi32, #tpu.memory_space<smem>>
    %10 = vector.broadcast %9 : i32 to vector<32x1xi32>
    %11 = arith.cmpi slt, %4, %10 : vector<32x1xi32>
    %cst = arith.constant 0.000000e+00 : f32
    %12 = vector.shape_cast %11 : vector<32x1xi1> to vector<32x1xi1>
    %13 = vector.broadcast %12 : vector<32x1xi1> to vector<32x128xi1>
    %14 = vector.broadcast %cst : f32 to vector<32x128xf32>
    %15 = arith.select %13, %5, %14 : vector<32x128xi1>, vector<32x128xf32>
    %c0_1 = arith.constant 0 : index
    %c0_2 = arith.constant 0 : index
    %c0_3 = arith.constant 0 : index
    %16 = vector.load %arg3[%c0_1, %c0_2, %c0_3] : memref<2x32x128xbf16, #tpu.memory_space<vmem>>, vector<1x32x128xbf16>
    %17 = vector.shape_cast %16 : vector<1x32x128xbf16> to vector<32x128xbf16>
    %18 = arith.extf %17 : vector<32x128xbf16> to vector<32x128xf32>
    %19 = arith.addf %18, %15 : vector<32x128xf32>
    %20 = arith.truncf %19 : vector<32x128xf32> to vector<32x128xbf16>
    %c0_4 = arith.constant 0 : index
    %c0_5 = arith.constant 0 : index
    %c0_6 = arith.constant 0 : index
    %21 = vector.load %arg5[%c0_4, %c0_5, %c0_6] : memref<2x32x128xbf16, #tpu.memory_space<vmem>>, vector<1x32x128xbf16>
    %22 = vector.shape_cast %21 : vector<1x32x128xbf16> to vector<32x128xbf16>
    %23 = vector.shape_cast %20 : vector<32x128xbf16> to vector<1x32x128xbf16>
    tpu.vector_store %arg5[%c0_4, %c0_5, %c0_6], %23 {strides = array<i32>} : memref<2x32x128xbf16, #tpu.memory_space<vmem>>, vector<1x32x128xbf16>,
    %c1_i32 = arith.constant 1 : i32
    %24 = arith.addi %1, %c1_i32 : i32
    %c3_i32_7 = arith.constant 3 : i32
    %25 = arith.minsi %24, %c3_i32_7 : i32
    %26 = arith.index_cast %25 : i32 to index
    %27 = memref.load %arg2[%26] : memref<4xi32, #tpu.memory_space<smem>>
    %28 = vector.broadcast %27 : i32 to vector<32x1xi32>
    %29 = arith.cmpi slt, %4, %28 : vector<32x1xi32>
    %cst_8 = arith.constant 0.000000e+00 : f32
    %30 = vector.shape_cast %29 : vector<32x1xi1> to vector<32x1xi1>
    %31 = vector.broadcast %30 : vector<32x1xi1> to vector<32x128xi1>
    %32 = vector.broadcast %cst_8 : f32 to vector<32x128xf32>
    %33 = arith.select %31, %5, %32 : vector<32x128xi1>, vector<32x128xf32>
    %c1 = arith.constant 1 : index
    %c0_9 = arith.constant 0 : index
    %c0_10 = arith.constant 0 : index
    %34 = vector.load %arg3[%c1, %c0_9, %c0_10] : memref<2x32x128xbf16, #tpu.memory_space<vmem>>, vector<1x32x128xbf16>
    %35 = vector.shape_cast %34 : vector<1x32x128xbf16> to vector<32x128xbf16>
    %36 = arith.extf %35 : vector<32x128xbf16> to vector<32x128xf32>
    %37 = arith.addf %36, %33 : vector<32x128xf32>
    %38 = arith.truncf %37 : vector<32x128xf32> to vector<32x128xbf16>
    %c1_11 = arith.constant 1 : index
    %c0_12 = arith.constant 0 : index
    %c0_13 = arith.constant 0 : index
    %39 = vector.load %arg5[%c1_11, %c0_12, %c0_13] : memref<2x32x128xbf16, #tpu.memory_space<vmem>>, vector<1x32x128xbf16>
    %40 = vector.shape_cast %39 : vector<1x32x128xbf16> to vector<32x128xbf16>
    %41 = vector.shape_cast %38 : vector<32x128xbf16> to vector<1x32x128xbf16>
    tpu.vector_store %arg5[%c1_11, %c0_12, %c0_13], %41 {strides = array<i32>} : memref<2x32x128xbf16, #tpu.memory_space<vmem>>, vector<1x32x128xbf16>,
    return
  }
  func.func @transform_0(%arg0: i32, %arg1: i32, %arg2: memref<4xi32, #tpu.memory_space<smem>>) -> (i32, i32, i32) {
    %c0_i32 = arith.constant 0 : i32
    %c0_i32_0 = arith.constant 0 : i32
    return %arg1, %arg0, %c0_i32 : i32, i32, i32
  }
  func.func @transform_1(%arg0: i32, %arg1: i32, %arg2: memref<4xi32, #tpu.memory_space<smem>>) -> (i32, i32) {
    %c0_i32 = arith.constant 0 : i32
    %c0_i32_0 = arith.constant 0 : i32
    return %arg0, %c0_i32 : i32, i32
  }
  func.func @transform_2(%arg0: i32, %arg1: i32, %arg2: memref<4xi32, #tpu.memory_space<smem>>) -> (i32, i32, i32) {
    %c0_i32 = arith.constant 0 : i32
    %c0_i32_0 = arith.constant 0 : i32
    return %arg1, %arg0, %c0_i32 : i32, i32, i32
  }
}

</mosaic_0001>

<llo_original>
// kernel: tpu_custom_call.1
$region0: #{tpu_custom_call.1}
  #allocation0 [shape = 'u32[]', space=smem, size = 0x4, offset = 0x4, fixed_abs, tag = 'smem constant byte address 0x4 - core index']
  #allocation1 [shape = 'u32[144,128]{1,0:T(1,128)}', space=vmem, size = 0x12000, scoped, tag = 'internal scratch']
  #allocation2 [shape = 's32[1]{0}', space=sflag, size = 0x4, scoped, tag = 'scoped memory for tpu_custom_call.1']
  #allocation3 [shape = 'u8[512]{0}', space=smem, size = 0x200, scoped, tag = 'prefetched SMEM operand 0']
  %s0 = inlined_call_operand.hbm [shape: s32[4], index: 0, kind: input, shape index: {}]
  %s1 = inlined_call_operand.hbm [shape: bf16[4,32,128], index: 1, kind: input, shape index: {}]
  %s2 = inlined_call_operand.hbm [shape: f32[32,128], index: 2, kind: input, shape index: {}]
  %s3 = inlined_call_operand.hbm [shape: bf16[4,32,128], index: 3, kind: output, shape index: {}]
  %s4 = sld [smem:[#allocation0]]
  $region49: #{tpu_custom_call.1} parent=0
    _
  %s6 = ssub.s32 1, %s4
  %s7 = scalar_select 0, %s6, %s4
  %9 = dma.hbm_to_smem %s0, 16, [#allocation3], [#allocation2]
  %10 = dma.done [#allocation2], 16
  %11 = sfence
  $region1: #{tpu_custom_call.1} parent=0
    #allocation4 [shape = 'u8[32768]{0}', space=vmem, size = 0x8000, scoped, tag = 'input window, operand 1']
    #allocation5 [shape = 's32[2]{0}', space=sflag, size = 0x8, scoped, tag = 'scoped memory for tpu_custom_call.1']
    #allocation6 [shape = 's32[2]{0}', space=sflag, size = 0x8, scoped, tag = 'scoped memory for tpu_custom_call.1']
    #allocation7 [shape = 'u8[16384]{0}', space=vmem, size = 0x4000, scoped, tag = 'input window, operand 2, single buffered']
    #allocation8 [shape = 's32[1]{0}', space=sflag, size = 0x4, scoped, tag = 'scoped memory for tpu_custom_call.1']
    #allocation9 [shape = 'u8[32768]{0}', space=vmem, size = 0x8000, scoped, tag = 'output window, operand 0']
    %12 = vsyncpa [#allocation5], 0
    %s13 = scalar_lea.sflag [#allocation5], 1
    %14 = vsyncpa %s13, 0
    %15 = vsyncpa [#allocation8], 0
    %16 = vsyncpa [#allocation6], 0
    %s17 = scalar_lea.sflag [#allocation6], 1
    %18 = vsyncpa %s17, 0
    loop: start=0, step=1, limit=4
    $region2: #{tpu_custom_call.1} parent=1 // loop_pre_header
      _
    $region3: #{tpu_custom_call.1} parent=1 // loop_header
      %s20 = sphi 0, %s24
      %p21 = scmp.ge.s32.totalorder %s20, 4
      %s27 = sphi 0, %s39
      %s28 = sphi 0, %s35
      %s29 = sphi 0, %s27
      %s30 = sphi 0, %s28
      %s31 = sphi 0, %s29
      %s32 = sphi 0, %s30
      %s44 = sphi 0, %s46
      %s47 = sphi 0, %s44
      %s48 = sphi 0, %s47
      %s64 = sphi 0, %s48
      %s70 = sphi 0, %s72
      %s73 = sphi 0, %s70
      %s74 = sphi 0, %s73
      %s90 = sphi 0, %s74
      %s98 = sphi 0, %s100
      %s101 = sphi 0, %s98
      %s102 = sphi 0, %s101
      %s118 = sphi 0, %s102
    $region4: #{tpu_custom_call.1} parent=1 // loop_header_branch
      %23 = sbr.rel (%p21) target = $region8
    $region5: #{tpu_custom_call.1} parent=1 // loop_body
      %s25 = ssub.s32 %s20, 1
      %s26 = ssub.s32 %s20, 2
      %s33 = sadd.s32 1, %s28
      %p34 = scmp.ge.s32.totalorder %s33, 2
      %s35 = scalar_select %p34, 0, %s33
      %s36 = sadd.s32 1, %s27
      %s37 = scalar_select %p34, %s36, %s27
      %p38 = scmp.ge.s32.totalorder %s37, 1
      %s39 = scalar_select %p38, 0, %s37
      %s40 = ssub.s32 %s28, %s35
      %s41 = ssub.s32 %s27, %s39
      %s42 = sor.u32 %s40, %s41
      %p43 = scmp.eq.s32.totalorder %s42, 0
      %s45 = sadd.s32 %s44, 1
      %s46 = scalar_select %p43, %s44, %s45
      %p49 = pneg %p43
      %p50 = scmp.eq.s32.totalorder %s20, 1
      %p51 = por %p49, %p50
      %p52 = scmp.ne.s32.totalorder %s44, %s47
      %p53 = scmp.eq.s32.totalorder %s20, 0
      %p54 = por %p52, %p53
      %p55 = scmp.ne.s32.totalorder %s44, %s47
      %p56 = scmp.eq.s32.totalorder %s25, 1
      %p57 = por %p55, %p56
      %p58 = scmp.ne.s32.totalorder %s47, %s48
      %p59 = scmp.eq.s32.totalorder %s25, 0
      %p60 = por %p58, %p59
      %p61 = scmp.ne.s32.totalorder %s47, %s48
      %p62 = scmp.eq.s32.totalorder %s26, 1
      %p63 = por %p61, %p62
      %p65 = scmp.ne.s32.totalorder %s48, %s64
      %p66 = scmp.eq.s32.totalorder %s26, 0
      %p67 = por %p65, %p66
      %s68 = ssub.s32 %s27, %s39
      %p69 = scmp.eq.s32.totalorder %s68, 0
      %s71 = sadd.s32 %s70, 1
      %s72 = scalar_select %p69, %s70, %s71
      %p75 = pneg %p69
      %p76 = scmp.eq.s32.totalorder %s20, 1
      %p77 = por %p75, %p76
      %p78 = scmp.ne.s32.totalorder %s70, %s73
      %p79 = scmp.eq.s32.totalorder %s20, 0
      %p80 = por %p78, %p79
      %p81 = scmp.ne.s32.totalorder %s70, %s73
      %p82 = scmp.eq.s32.totalorder %s25, 1
      %p83 = por %p81, %p82
      %p84 = scmp.ne.s32.totalorder %s73, %s74
      %p85 = scmp.eq.s32.totalorder %s25, 0
      %p86 = por %p84, %p85
      %p87 = scmp.ne.s32.totalorder %s73, %s74
      %p88 = scmp.eq.s32.totalorder %s26, 1
      %p89 = por %p87, %p88
      %p91 = scmp.ne.s32.totalorder %s74, %s90
      %p92 = scmp.eq.s32.totalorder %s26, 0
      %p93 = por %p91, %p92
      %s94 = ssub.s32 %s28, %s35
      %s95 = ssub.s32 %s27, %s39
      %s96 = sor.u32 %s94, %s95
      %p97 = scmp.eq.s32.totalorder %s96, 0
      %s99 = sadd.s32 %s98, 1
      %s100 = scalar_select %p97, %s98, %s99
      %p103 = pneg %p97
      %p104 = scmp.eq.s32.totalorder %s20, 1
      %p105 = por %p103, %p104
      %p106 = scmp.ne.s32.totalorder %s98, %s101
      %p107 = scmp.eq.s32.totalorder %s20, 0
      %p108 = por %p106, %p107
      %p109 = scmp.ne.s32.totalorder %s98, %s101
      %p110 = scmp.eq.s32.totalorder %s25, 1
      %p111 = por %p109, %p110
      %p112 = scmp.ne.s32.totalorder %s101, %s102
      %p113 = scmp.eq.s32.totalorder %s25, 0
      %p114 = por %p112, %p113
      %p115 = scmp.ne.s32.totalorder %s101, %s102
      %p116 = scmp.eq.s32.totalorder %s26, 1
      %p117 = por %p115, %p116
      %p119 = scmp.ne.s32.totalorder %s102, %s118
      %p120 = scmp.eq.s32.totalorder %s26, 0
      %p121 = por %p119, %p120
      %p122 = scmp.le.s32.totalorder 1, %s20
      %p123 = scmp.lt.s32.totalorder %s20, 3
      %p124 = pnand %p122, %p123
      %p125 = pneg %p124
      // Predicated region
      $region9: #{tpu_custom_call.1} parent=5 // pred_check
        _
      $region10: #{tpu_custom_call.1} parent=5 // pred_check_branch
        %127 = sbr.rel (%p124) target = $region12
      $region11: #{tpu_custom_call.1} parent=5 // pred_region
        %s128 = ssub.s32 %s20, 1
        // Predicated region
        $region13: #{tpu_custom_call.1} parent=11 // pred_check
          %p129 = pneg %p86
        $region14: #{tpu_custom_call.1} parent=11 // pred_check_branch
          %131 = sbr.rel (%p129) target = $region16
        $region15: #{tpu_custom_call.1} parent=11 // pred_region
          %s132 = smul.u32 4, %s29
          %s134 = ssub.s32 512, 512
          %135 = vsyncadd [#allocation8], %s134
          %s136 = smul.addr %s132, 128
          %s137 = scalar_lea.hbm %s2, %s136
          %s138 = sshll.u32 [#allocation7], 4
          %s139 = int_to_ptr.vmem [resolvable:$true] %s138
          %144 = dma.hbm_to_vmem [thread:$0]  %s137, 512, %s139, [#allocation8], 128, 128, 8
        $region16: #{tpu_custom_call.1} parent=11 // pred_fallthru
          _
      $region12: #{tpu_custom_call.1} parent=5 // pred_fallthru
        _
      %p145 = scmp.lt.s32.totalorder %s20, 2
      // Predicated region
      $region17: #{tpu_custom_call.1} parent=5 // pred_check
        %p146 = pneg %p145
      $region18: #{tpu_custom_call.1} parent=5 // pred_check_branch
        %148 = sbr.rel (%p146) target = $region20
      $region19: #{tpu_custom_call.1} parent=5 // pred_region
        // Predicated region
        $region21: #{tpu_custom_call.1} parent=19 // pred_check
          %p149 = pneg %p54
        $region22: #{tpu_custom_call.1} parent=19 // pred_check_branch
          %151 = sbr.rel (%p149) target = $region24
        $region23: #{tpu_custom_call.1} parent=19 // pred_region
          %s152 = sand.u32 %s44, 1
          %s153 = scalar_lea.sflag [#allocation5], %s152
          %s154 = sand.u32 %s44, 1
          %s155 = smul.addr %s154, 32
          %s156 = scalar_lea.vmem [#allocation4], %s155
          %s157 = smul.u32 2, %s28
          %s158 = smul.u32 4, %s27
          %s160 = ssub.s32 512, 512
          %161 = vsyncadd %s153, %s160
          %s162 = smul.addr %s157, 4
          %s163 = sadd.s32 %s158, %s162
          %s164 = smul.addr %s163, 64
          %s165 = scalar_lea.hbm %s1, %s164
          %s166 = sshll.u32 %s156, 4
          %s167 = int_to_ptr.vmem [resolvable:$true] %s166
          %172 = dma.hbm_to_vmem [thread:$0]  %s165, 512, %s167, %s153, 64, 64, 4
        $region24: #{tpu_custom_call.1} parent=19 // pred_fallthru
          _
      $region20: #{tpu_custom_call.1} parent=5 // pred_fallthru
        _
      %p173 = scmp.le.s32.totalorder 1, %s20
      %p174 = scmp.lt.s32.totalorder %s20, 3
      %p175 = pnand %p173, %p174
      %p176 = pneg %p175
      // Predicated region
      $region25: #{tpu_custom_call.1} parent=5 // pred_check
        _
      $region26: #{tpu_custom_call.1} parent=5 // pred_check_branch
        %178 = sbr.rel (%p175) target = $region28
      $region27: #{tpu_custom_call.1} parent=5 // pred_region
        %s179 = ssub.s32 %s20, 1
        %s180 = sand.u32 %s47, 1
        %s181 = scalar_lea.sflag [#allocation5], %s180
        %s182 = sand.u32 %s47, 1
        %s183 = smul.addr %s182, 32
        %s184 = scalar_lea.vmem [#allocation4], %s183
        // Predicated region
        $region29: #{tpu_custom_call.1} parent=27 // pred_check
          %p185 = pneg %p60
        $region30: #{tpu_custom_call.1} parent=27 // pred_check_branch
          %187 = sbr.rel (%p185) target = $region32
        $region31: #{tpu_custom_call.1} parent=27 // pred_region
          %188 = dma.done %s181, 512
        $region32: #{tpu_custom_call.1} parent=27 // pred_fallthru
          _
        // Predicated region
        $region33: #{tpu_custom_call.1} parent=27 // pred_check
          %p189 = pneg %p86
        $region34: #{tpu_custom_call.1} parent=27 // pred_check_branch
          %191 = sbr.rel (%p189) target = $region36
        $region35: #{tpu_custom_call.1} parent=27 // pred_region
          %192 = dma.done [#allocation8], 512
        $region36: #{tpu_custom_call.1} parent=27 // pred_fallthru
          _
        %s193 = sand.u32 %s47, 1
        %s194 = scalar_lea.sflag [#allocation5], %s193
        %s195 = sand.u32 %s47, 1
        %s196 = smul.addr %s195, 32
        %s197 = scalar_lea.vmem [#allocation4], %s196
        %p198 = pneg %p60
        %p199 = pneg %p57
        %p200 = pneg %p86
        %p201 = pneg %p83
        %p202 = pneg %p114
        %p203 = pneg %p111
        %s204 = sand.u32 %s101, 1
        %s205 = scalar_lea.sflag [#allocation6], %s204
        %s206 = sand.u32 %s101, 1
        %s207 = smul.addr %s206, 32
        %s208 = scalar_lea.vmem [#allocation9], %s207
        %s209 = smul.u32 2, %s30
        %s210 = smul.u32 4, %s29
        %s211 = smul.u32 4, %s29
        %s212 = smul.u32 2, %s30
        %s213 = smul.u32 4, %s29
        %s214 = smul.u32 %s29, 32
        %s215 = smul.u32 %s30, 2
        %v216 = vlaneseq
        %v217 = vshrl.u32 %v216, 7
        %v218 = vadd.s32 %v217, 8
        %v219 = vadd.s32 %v217, 16
        %v220 = vadd.s32 %v217, 24
        %v221 = vstv %s214
        %v222 = vadd.s32 %v221, %v217
        %v223 = vadd.s32 %v221, %v218
        %v224 = vadd.s32 %v221, %v219
        %v225 = vadd.s32 %v221, %v220
        %v226 = vld [vmem:[#allocation7] sm:$0xff]
        %v227 = vld [vmem:[#allocation7 + $0x8] sm:$0xff]
        %v228 = vld [vmem:[#allocation7 + $0x10] sm:$0xff]
        %v229 = vld [vmem:[#allocation7 + $0x18] sm:$0xff]
        %p230 = scmp.lt.s32.totalorder %s215, 3
        %s231 = scalar_select %p230, %s215, 3
        %s232 = sld [smem:[#allocation3 + %s231]]
        %v233 = vstv %s232
        %vm234 = vcmp.lt.s32.totalorder %v222, %v233
        %vm235 = vcmp.lt.s32.totalorder %v223, %v233
        %vm236 = vcmp.lt.s32.totalorder %v224, %v233
        %vm237 = vcmp.lt.s32.totalorder %v225, %v233
        %v238 = vsel %vm234, 1, 0
        %v239 = vsel %vm235, 1, 0
        %v240 = vsel %vm236, 1, 0
        %v241 = vsel %vm237, 1, 0
        %vm242 = vcmp.eq.s32.totalorder %v238, 1
        %vm243 = vcmp.eq.s32.totalorder %v239, 1
        %vm244 = vcmp.eq.s32.totalorder %v240, 1
        %vm245 = vcmp.eq.s32.totalorder %v241, 1
        %v246 = vsel %vm242, %v226, 0.0
        %v247 = vsel %vm243, %v227, 0.0
        %v248 = vsel %vm244, %v228, 0.0
        %v249 = vsel %vm245, %v229, 0.0
        %v250 = vld [vmem:[%s184] sm:$0xf]
        %v251 = vld [vmem:[%s184 + $0x4] sm:$0xf]
        %v252 = vld [vmem:[%s184 + $0x8] sm:$0xf]
        %v253 = vld [vmem:[%s184 + $0xc] sm:$0xf]
        %v254 = vunpack.c.l.bf16 %v250
        %v255 = vunpack.c.l.bf16 %v251
        %v256 = vunpack.c.l.bf16 %v252
        %v257 = vunpack.c.l.bf16 %v253
        %v258 = vadd.f32 %v254, %v246
        %v259 = vadd.f32 %v255, %v247
        %v260 = vadd.f32 %v256, %v248
        %v261 = vadd.f32 %v257, %v249
        %v262 = vpack.c.bf16 %v259, %v258
        %v263 = vpack.c.bf16 %v261, %v260
        %v266 = vunpack.c.l.b16 %v262
        %v267 = vunpack.c.h.b16 %v262
        %v268 = vunpack.c.l.b16 %v263
        %v269 = vunpack.c.h.b16 %v263
        %v270 = vpack.c.b16 %v266, %v266
        %v271 = vpack.c.b16 %v267, %v267
        %v272 = vpack.c.b16 %v268, %v268
        %v273 = vpack.c.b16 %v269, %v269
        %278 = vst [vmem:[%s208] sm:$0xf] %v270
        %279 = vst [vmem:[%s208 + $0x4] sm:$0xf] %v271
        %280 = vst [vmem:[%s208 + $0x8] sm:$0xf] %v272
        %281 = vst [vmem:[%s208 + $0xc] sm:$0xf] %v273
        %s282 = sadd.s32 %s215, 1
        %p283 = scmp.lt.s32.totalorder %s282, 3
        %s284 = scalar_select %p283, %s282, 3
        %s285 = sld [smem:[#allocation3 + %s284]]
        %v286 = vstv %s285
        %vm287 = vcmp.lt.s32.totalorder %v222, %v286
        %vm288 = vcmp.lt.s32.totalorder %v223, %v286
        %vm289 = vcmp.lt.s32.totalorder %v224, %v286
        %vm290 = vcmp.lt.s32.totalorder %v225, %v286
        %v291 = vsel %vm287, 1, 0
        %v292 = vsel %vm288, 1, 0
        %v293 = vsel %vm289, 1, 0
        %v294 = vsel %vm290, 1, 0
        %vm295 = vcmp.eq.s32.totalorder %v291, 1
        %vm296 = vcmp.eq.s32.totalorder %v292, 1
        %vm297 = vcmp.eq.s32.totalorder %v293, 1
        %vm298 = vcmp.eq.s32.totalorder %v294, 1
        %v299 = vsel %vm295, %v226, 0.0
        %v300 = vsel %vm296, %v227, 0.0
        %v301 = vsel %vm297, %v228, 0.0
        %v302 = vsel %vm298, %v229, 0.0
        %s303 = scalar_lea.vmem %s184, 16 [#allocation4]
        %v304 = vld [vmem:[%s303] sm:$0xf]
        %v305 = vld [vmem:[%s303 + $0x4] sm:$0xf]
        %v306 = vld [vmem:[%s303 + $0x8] sm:$0xf]
        %v307 = vld [vmem:[%s303 + $0xc] sm:$0xf]
        %v308 = vunpack.c.l.bf16 %v304
        %v309 = vunpack.c.l.bf16 %v305
        %v310 = vunpack.c.l.bf16 %v306
        %v311 = vunpack.c.l.bf16 %v307
        %v312 = vadd.f32 %v308, %v299
        %v313 = vadd.f32 %v309, %v300
        %v314 = vadd.f32 %v310, %v301
        %v315 = vadd.f32 %v311, %v302
        %v316 = vpack.c.bf16 %v313, %v312
        %v317 = vpack.c.bf16 %v315, %v314
        %v320 = vunpack.c.l.b16 %v316
        %v321 = vunpack.c.h.b16 %v316
        %v322 = vunpack.c.l.b16 %v317
        %v323 = vunpack.c.h.b16 %v317
        %v324 = vpack.c.b16 %v320, %v320
        %v325 = vpack.c.b16 %v321, %v321
        %v326 = vpack.c.b16 %v322, %v322
        %v327 = vpack.c.b16 %v323, %v323
        %s332 = scalar_lea.vmem %s208, 16 [#allocation9]
        %333 = vst [vmem:[%s332] sm:$0xf] %v324
        %334 = vst [vmem:[%s332 + $0x4] sm:$0xf] %v325
        %335 = vst [vmem:[%s332 + $0x8] sm:$0xf] %v326
        %336 = vst [vmem:[%s332 + $0xc] sm:$0xf] %v327
        %s337 = sand.u32 %s101, 1
        %s338 = scalar_lea.sflag [#allocation6], %s337
        %s339 = sand.u32 %s101, 1
        %s340 = smul.addr %s339, 32
        %s341 = scalar_lea.vmem [#allocation9], %s340
        // Predicated region
        $region37: #{tpu_custom_call.1} parent=27 // pred_check
          %p342 = pneg %p111
        $region38: #{tpu_custom_call.1} parent=27 // pred_check_branch
          %344 = sbr.rel (%p342) target = $region40
        $region39: #{tpu_custom_call.1} parent=27 // pred_region
          %s345 = smul.u32 2, %s30
          %s346 = smul.u32 4, %s29
          %s348 = ssub.s32 512, 512
          %349 = vsyncadd %s338, %s348
          %s350 = smul.addr %s345, 4
          %s351 = sadd.s32 %s346, %s350
          %s352 = smul.addr %s351, 64
          %s353 = scalar_lea.hbm %s3, %s352
          %s354 = sshll.u32 %s341, 4
          %s355 = int_to_ptr.vmem [resolvable:$true] %s354
          %360 = dma.vmem_to_hbm [thread:$0]  %s355, 512, %s353, %s338, 64, 64, 4
        $region40: #{tpu_custom_call.1} parent=27 // pred_fallthru
          _
      $region28: #{tpu_custom_call.1} parent=5 // pred_fallthru
        _
      %p361 = scmp.le.s32.totalorder 2, %s20
      // Predicated region
      $region41: #{tpu_custom_call.1} parent=5 // pred_check
        %p362 = pneg %p361
      $region42: #{tpu_custom_call.1} parent=5 // pred_check_branch
        %364 = sbr.rel (%p362) target = $region44
      $region43: #{tpu_custom_call.1} parent=5 // pred_region
        %s365 = ssub.s32 %s20, 2
        // Predicated region
        $region45: #{tpu_custom_call.1} parent=43 // pred_check
          %p366 = pneg %p117
        $region46: #{tpu_custom_call.1} parent=43 // pred_check_branch
          %368 = sbr.rel (%p366) target = $region48
        $region47: #{tpu_custom_call.1} parent=43 // pred_region
          %s369 = sand.u32 %s102, 1
          %s370 = scalar_lea.sflag [#allocation6], %s369
          %s371 = sand.u32 %s102, 1
          %s372 = smul.addr %s371, 32
          %s373 = scalar_lea.vmem [#allocation9], %s372
          %374 = dma.done %s370, 512
        $region48: #{tpu_custom_call.1} parent=43 // pred_fallthru
          _
      $region44: #{tpu_custom_call.1} parent=5 // pred_fallthru
        _
    $region6: #{tpu_custom_call.1} parent=1 // loop_footer
      %s24 = sadd.s32 1, %s20
    $region7: #{tpu_custom_call.1} parent=1 // loop_footer_branch
      %19 = sbr.rel target = $region3
    $region8: #{tpu_custom_call.1} parent=1 // loop_exit
      _
    %375 = vsyncpa [#allocation5], 1
    %s376 = scalar_lea.sflag [#allocation5], 1
    %377 = vsyncpa %s376, 1
    %378 = vsyncpa [#allocation8], 1
    %379 = vsyncpa [#allocation6], 1
    %s380 = scalar_lea.sflag [#allocation6], 1
    %381 = vsyncpa %s380, 1

</llo_original>
